<compile_context>
chip_gen: v7x
topology: tpu7x:2x2x1
jax: 0.10.0
libtpu: 0.0.40
codegen_flags: <defaults>
</compile_context>

<pallas_src>
import math

import jax
import jax.numpy as jnp
from jax import lax
from jax.experimental import pallas as pl
from jax.experimental.pallas import tpu as pltpu


# ----------------------------- Pallas kernel -------------------------------

def layernorm_kernel(x_ref, w_ref, b_ref, o_ref):
    # x_ref: (tile_R, C)   w_ref/b_ref: (1, C)   o_ref: (tile_R, C)
    x = x_ref[...].astype(jnp.float32)
    c_inv = jnp.float32(1.0 / x.shape[-1])

    # Single pass: two independent XLU reductions (not serialized).
    s1 = jnp.sum(x, axis=-1, keepdims=True)          # (tile_R, 1)
    s2 = jnp.sum(x * x, axis=-1, keepdims=True)      # (tile_R, 1)
    mu = s1 * c_inv
    var = jnp.maximum(s2 * c_inv - mu * mu, 0.0)     # biased var (unbiased=False)
    inv = lax.rsqrt(var + 1e-5)                      # EUP rsqrt

    w = w_ref[...].astype(jnp.float32)               # (1, C) broadcast
    b = b_ref[...].astype(jnp.float32)

    o_ref[...] = ((x - mu) * inv * w + b).astype(o_ref.dtype)


# ------------------------------ wrapper -------------------------------------

def _round_up(v: int, m: int) -> int:
    return ((v + m - 1) // m) * m


def _pick_row_tile(rows: int, feat: int, dtype) -> int:
    """Row-tile (sublane) size: dtype-aligned, ~2 MiB byte budget, >=2 grid steps."""
    itemsize = jnp.dtype(dtype).itemsize
    align = max(8, 32 // itemsize)          # 8 (f32), 16 (bf16/f16), 32 (int8/fp8)

    # ~2 MiB per x block: big enough to amortize per-step overhead on
    # v6e/v7x HBM, small enough that double-buffered x + out fits v5e's
    # 16 MiB default scoped VMEM.
    budget_rows = (2 * 1024 * 1024) // max(1, feat * itemsize)
    tile = max(align, (budget_rows // align) * align)

    # Guarantee >=2 (ideally >=4) grid steps so "parallel" can split work
    # across v7x's two TensorCores.
    if rows > align:
        min_steps = 4 if rows >= 4 * align else 2
        cap = max(align, _round_up(pl.cdiv(rows, min_steps), align))
        tile = min(tile, cap)

    # Never exceed the (row-aligned) array extent.
    tile = min(tile, _round_up(rows, align))
    return tile


def with_bias_layernorm(x, weight, bias):
    """x: (..., C); weight, bias: (C,).  Returns same shape/dtype as x."""
    orig_shape = x.shape
    C = orig_shape[-1]
    assert weight.shape == (C,) and bias.shape == (C,)

    rows = int(math.prod(orig_shape[:-1])) if len(orig_shape) > 1 else 1
    x2 = x.reshape(rows, C)
    w2 = weight.reshape(1, C)
    b2 = bias.reshape(1, C)

    tile_r = _pick_row_tile(rows, C, x.dtype)
    grid = (pl.cdiv(rows, tile_r),)          # last block may be partial (rows masked)

    out = pl.pallas_call(
        layernorm_kernel,
        out_shape=jax.ShapeDtypeStruct((rows, C), x.dtype),
        grid_spec=pltpu.PrefetchScalarGridSpec(
            num_scalar_prefetch=0,
            grid=grid,
            in_specs=[
                pl.BlockSpec((tile_r, C), lambda i: (i, 0)),
                pl.BlockSpec((1, C), lambda i: (0, 0)),
                pl.BlockSpec((1, C), lambda i: (0, 0)),
            ],
            out_specs=pl.BlockSpec((tile_r, C), lambda i: (i, 0)),
        ),
        compiler_params=pltpu.CompilerParams(
            dimension_semantics=("parallel",)),
    )(x2, w2, b2)
    return out.reshape(orig_shape)


def layernorm_reference(x, weight, bias):
    """Plain-JAX reference matching the PyTorch forward exactly (two-pass)."""
    x32 = x.astype(jnp.float32)
    mu = jnp.mean(x32, axis=-1, keepdims=True)
    var = jnp.mean((x32 - mu) ** 2, axis=-1, keepdims=True)
    y = (x32 - mu) / jnp.sqrt(var + 1e-5) * weight.astype(jnp.float32) \
        + bias.astype(jnp.float32)
    return y.astype(x.dtype)


# --------------------------------- main --------------------------------------

if __name__ == "__main__":
    key = jax.random.PRNGKey(0)
    kx, kw, kb, kx2, kx3 = jax.random.split(key, 5)

    # S2Former applies this norm over channels of a (B, H*W, C) tensor:
    # B=2, spatial 16x16 -> 256 tokens, C=128 (lane-dense normalized axis).
    B, T, C = 2, 256, 128
    x = jax.random.normal(kx, (B, T, C), dtype=jnp.float32)

    # Module initializes weight=ones, bias=zeros; perturb them so the
    # scale/shift path is actually exercised by the check.
    weight = 1.0 + 0.1 * jax.random.normal(kw, (C,), dtype=jnp.float32)
    bias = 0.1 * jax.random.normal(kb, (C,), dtype=jnp.float32)

    out = with_bias_layernorm(x, weight, bias)
    out = jax.block_until_ready(out)
    ref = layernorm_reference(x, weight, bias)
    assert out.shape == x.shape, out.shape
    assert jnp.allclose(out, ref, atol=1e-4, rtol=1e-4), "f32 mismatch vs reference"

    # Partial-last-block path: rows not divisible by the row tile (cdiv grid).
    x_odd = jax.random.normal(kx2, (2, 75, C), dtype=jnp.float32)   # rows = 150
    out_odd = jax.block_until_ready(with_bias_layernorm(x_odd, weight, bias))
    ref_odd = layernorm_reference(x_odd, weight, bias)
    assert jnp.allclose(out_odd, ref_odd, atol=1e-4, rtol=1e-4), \
        "partial-block mismatch vs reference"

    # bf16 path: dtype-aware row alignment (multiple of 16), bf16 I/O,
    # f32 accumulation inside the kernel.
    x_bf = jax.random.normal(kx3, (2, 64, C), dtype=jnp.float32).astype(jnp.bfloat16)
    out_bf = jax.block_until_ready(
        with_bias_layernorm(x_bf, weight.astype(jnp.bfloat16),
                            bias.astype(jnp.bfloat16)))
    ref_bf = layernorm_reference(x_bf, weight.astype(jnp.bfloat16),
                                 bias.astype(jnp.bfloat16))
    assert jnp.allclose(out_bf.astype(jnp.float32), ref_bf.astype(jnp.float32),
                        atol=6e-2, rtol=6e-2), "bf16 mismatch vs reference"

    print("KERNEL_OK")
</pallas_src>

<mosaic_0001>
module attributes {stable_mosaic.version = 11 : i64} {
  func.func @layernorm_kernel(%arg0: i32, %arg1: memref<128x128xf32, #tpu.memory_space<vmem>>, %arg2: memref<1x128xf32, #tpu.memory_space<vmem>>, %arg3: memref<1x128xf32, #tpu.memory_space<vmem>>, %arg4: memref<128x128xf32, #tpu.memory_space<vmem>>) attributes {dimension_semantics = [#tpu.dimension_semantics<parallel>], iteration_bounds = array<i64: 4>, scalar_prefetch = 0 : i64, scratch_operands = 0 : i64, tpu.core_type = #tpu.core_type<tc>, window_params = [{transform_indices = @transform_0, window_bounds = array<i64: 128, 128>}, {pipeline_mode = #tpu.pipeline_mode<synchronous>, transform_indices = @transform_1, window_bounds = array<i64: 1, 128>}, {pipeline_mode = #tpu.pipeline_mode<synchronous>, transform_indices = @transform_2, window_bounds = array<i64: 1, 128>}, {transform_indices = @transform_3, window_bounds = array<i64: 128, 128>}]} {
    %c0 = arith.constant 0 : index
    %c0_0 = arith.constant 0 : index
    %0 = vector.load %arg1[%c0, %c0_0] : memref<128x128xf32, #tpu.memory_space<vmem>>, vector<128x128xf32>
    %cst = arith.constant dense<0.000000e+00> : vector<128xf32>
    %1 = vector.multi_reduction <add>, %0, %cst [1] : vector<128x128xf32> to vector<128xf32>
    %2 = vector.shape_cast %1 : vector<128xf32> to vector<128x1xf32>
    %3 = arith.mulf %0, %0 : vector<128x128xf32>
    %cst_1 = arith.constant dense<0.000000e+00> : vector<128xf32>
    %4 = vector.multi_reduction <add>, %3, %cst_1 [1] : vector<128x128xf32> to vector<128xf32>
    %5 = vector.shape_cast %4 : vector<128xf32> to vector<128x1xf32>
    %cst_2 = arith.constant 7.812500e-03 : f32
    %6 = vector.broadcast %cst_2 : f32 to vector<128x1xf32>
    %7 = arith.mulf %2, %6 : vector<128x1xf32>
    %cst_3 = arith.constant 7.812500e-03 : f32
    %8 = vector.broadcast %cst_3 : f32 to vector<128x1xf32>
    %9 = arith.mulf %5, %8 : vector<128x1xf32>
    %10 = arith.mulf %7, %7 : vector<128x1xf32>
    %11 = arith.subf %9, %10 : vector<128x1xf32>
    %cst_4 = arith.constant 0.000000e+00 : f32
    %12 = vector.broadcast %cst_4 : f32 to vector<128x1xf32>
    %13 = arith.maximumf %11, %12 : vector<128x1xf32>
    %cst_5 = arith.constant 9.99999974E-6 : f32
    %14 = vector.broadcast %cst_5 : f32 to vector<128x1xf32>
    %15 = arith.addf %13, %14 : vector<128x1xf32>
    %16 = math.rsqrt %15 : vector<128x1xf32>
    %c0_6 = arith.constant 0 : index
    %c0_7 = arith.constant 0 : index
    %17 = vector.load %arg2[%c0_6, %c0_7] : memref<1x128xf32, #tpu.memory_space<vmem>>, vector<1x128xf32>
    %c0_8 = arith.constant 0 : index
    %c0_9 = arith.constant 0 : index
    %18 = vector.load %arg3[%c0_8, %c0_9] : memref<1x128xf32, #tpu.memory_space<vmem>>, vector<1x128xf32>
    %19 = vector.broadcast %7 : vector<128x1xf32> to vector<128x128xf32>
    %20 = arith.subf %0, %19 : vector<128x128xf32>
    %21 = vector.broadcast %16 : vector<128x1xf32> to vector<128x128xf32>
    %22 = arith.mulf %20, %21 : vector<128x128xf32>
    %23 = vector.broadcast %17 : vector<1x128xf32> to vector<128x128xf32>
    %24 = arith.mulf %22, %23 : vector<128x128xf32>
    %25 = vector.broadcast %18 : vector<1x128xf32> to vector<128x128xf32>
    %26 = arith.addf %24, %25 : vector<128x128xf32>
    %c0_10 = arith.constant 0 : index
    %c0_11 = arith.constant 0 : index
    %27 = vector.load %arg4[%c0_10, %c0_11] : memref<128x128xf32, #tpu.memory_space<vmem>>, vector<128x128xf32>
    tpu.vector_store %arg4[%c0_10, %c0_11], %26 {strides = array<i32>} : memref<128x128xf32, #tpu.memory_space<vmem>>, vector<128x128xf32>,
    return
  }
  func.func @transform_0(%arg0: i32) -> (i32, i32) {
    %c0_i32 = arith.constant 0 : i32
    %c0_i32_0 = arith.constant 0 : i32
    return %arg0, %c0_i32 : i32, i32
  }
  func.func @transform_1(%arg0: i32) -> (i32, i32) {
    %c0_i32 = arith.constant 0 : i32
    %c0_i32_0 = arith.constant 0 : i32
    %c0_i32_1 = arith.constant 0 : i32
    return %c0_i32, %c0_i32_0 : i32, i32
  }
  func.func @transform_2(%arg0: i32) -> (i32, i32) {
    %c0_i32 = arith.constant 0 : i32
    %c0_i32_0 = arith.constant 0 : i32
    %c0_i32_1 = arith.constant 0 : i32
    return %c0_i32, %c0_i32_0 : i32, i32
  }
  func.func @transform_3(%arg0: i32) -> (i32, i32) {
    %c0_i32 = arith.constant 0 : i32
    %c0_i32_0 = arith.constant 0 : i32
    return %arg0, %c0_i32 : i32, i32
  }
}

</mosaic_0001>

<llo_original>
// kernel: tpu_custom_call.1
$region0: #{tpu_custom_call.1}
  #allocation0 [shape = 'u32[]', space=smem, size = 0x4, offset = 0x4, fixed_abs, tag = 'smem constant byte address 0x4 - core index']
  #allocation1 [shape = 'u32[144,128]{1,0:T(1,128)}', space=vmem, size = 0x12000, scoped, tag = 'internal scratch']
  %s0 = inlined_call_operand.hbm [shape: f32[512,128], index: 0, kind: input, shape index: {}]
  %s1 = inlined_call_operand.vmem [shape: f32[1,128], index: 1, kind: input, shape index: {}]
  %s2 = inlined_call_operand.vmem [shape: f32[1,128], index: 2, kind: input, shape index: {}]
  %s3 = inlined_call_operand.hbm [shape: f32[512,128], index: 3, kind: output, shape index: {}]
  %s4 = sld [smem:[#allocation0]]
  $region49: #{tpu_custom_call.1} parent=0
    _
  %s6 = ssub.s32 1, %s4
  %s7 = scalar_select 0, %s6, %s4
  $region1: #{tpu_custom_call.1} parent=0
    #allocation2 [shape = 'u8[131072]{0}', space=vmem, size = 0x20000, scoped, tag = 'input window, operand 0']
    #allocation3 [shape = 's32[2]{0}', space=sflag, size = 0x8, scoped, tag = 'scoped memory for tpu_custom_call.1']
    #allocation4 [shape = 's32[2]{0}', space=sflag, size = 0x8, scoped, tag = 'scoped memory for tpu_custom_call.1']
    #allocation5 [shape = 'u8[131072]{0}', space=vmem, size = 0x20000, scoped, tag = 'output window, operand 0']
    %8 = vsyncpa [#allocation3], 0
    %s9 = scalar_lea.sflag [#allocation3], 1
    %10 = vsyncpa %s9, 0
    %11 = vsyncpa [#allocation4], 0
    %s12 = scalar_lea.sflag [#allocation4], 1
    %13 = vsyncpa %s12, 0
    loop: start=0, step=1, limit=6
    $region2: #{tpu_custom_call.1} parent=1 // loop_pre_header
      _
    $region3: #{tpu_custom_call.1} parent=1 // loop_header
      %s15 = sphi 0, %s19
      %p16 = scmp.ge.s32.totalorder %s15, 6
      %s25 = sphi 0, %s27
      %s28 = sphi 0, %s25
      %s29 = sphi 0, %s28
      %s45 = sphi 0, %s29
      %s49 = sphi 0, %s49
      %s51 = sphi 0, %s49
      %s52 = sphi 0, %s51
      %s66 = sphi 0, %s52
      %s70 = sphi 0, %s70
      %s72 = sphi 0, %s70
      %s73 = sphi 0, %s72
      %s87 = sphi 0, %s73
      %s93 = sphi 0, %s95
      %s96 = sphi 0, %s93
      %s97 = sphi 0, %s96
      %s113 = sphi 0, %s97
    $region4: #{tpu_custom_call.1} parent=1 // loop_header_branch
      %18 = sbr.rel (%p16) target = $region8
    $region5: #{tpu_custom_call.1} parent=1 // loop_body
      %s20 = ssub.s32 %s15, 1
      %s21 = ssub.s32 %s15, 2
      %s22 = sadd.s32 %s15, 1
      %s23 = ssub.s32 %s15, %s22
      %p24 = scmp.eq.s32.totalorder %s23, 0
      %s26 = sadd.s32 %s25, 1
      %s27 = scalar_select %p24, %s25, %s26
      %p30 = pneg %p24
      %p31 = scmp.eq.s32.totalorder %s15, 3
      %p32 = por %p30, %p31
      %p33 = scmp.ne.s32.totalorder %s25, %s28
      %p34 = scmp.eq.s32.totalorder %s15, 0
      %p35 = por %p33, %p34
      %p36 = scmp.ne.s32.totalorder %s25, %s28
      %p37 = scmp.eq.s32.totalorder %s20, 3
      %p38 = por %p36, %p37
      %p39 = scmp.ne.s32.totalorder %s28, %s29
      %p40 = scmp.eq.s32.totalorder %s20, 0
      %p41 = por %p39, %p40
      %p42 = scmp.ne.s32.totalorder %s28, %s29
      %p43 = scmp.eq.s32.totalorder %s21, 3
      %p44 = por %p42, %p43
      %p46 = scmp.ne.s32.totalorder %s29, %s45
      %p47 = scmp.eq.s32.totalorder %s21, 0
      %p48 = por %p46, %p47
      %s50 = sadd.s32 %s49, 1
      %p53 = scmp.eq.s32.totalorder %s15, 3
      %p54 = scmp.ne.s32.totalorder %s49, %s51
      %p55 = scmp.eq.s32.totalorder %s15, 0
      %p56 = por %p54, %p55
      %p57 = scmp.ne.s32.totalorder %s49, %s51
      %p58 = scmp.eq.s32.totalorder %s20, 3
      %p59 = por %p57, %p58
      %p60 = scmp.ne.s32.totalorder %s51, %s52
      %p61 = scmp.eq.s32.totalorder %s20, 0
      %p62 = por %p60, %p61
      %p63 = scmp.ne.s32.totalorder %s51, %s52
      %p64 = scmp.eq.s32.totalorder %s21, 3
      %p65 = por %p63, %p64
      %p67 = scmp.ne.s32.totalorder %s52, %s66
      %p68 = scmp.eq.s32.totalorder %s21, 0
      %p69 = por %p67, %p68
      %s71 = sadd.s32 %s70, 1
      %p74 = scmp.eq.s32.totalorder %s15, 3
      %p75 = scmp.ne.s32.totalorder %s70, %s72
      %p76 = scmp.eq.s32.totalorder %s15, 0
      %p77 = por %p75, %p76
      %p78 = scmp.ne.s32.totalorder %s70, %s72
      %p79 = scmp.eq.s32.totalorder %s20, 3
      %p80 = por %p78, %p79
      %p81 = scmp.ne.s32.totalorder %s72, %s73
      %p82 = scmp.eq.s32.totalorder %s20, 0
      %p83 = por %p81, %p82
      %p84 = scmp.ne.s32.totalorder %s72, %s73
      %p85 = scmp.eq.s32.totalorder %s21, 3
      %p86 = por %p84, %p85
      %p88 = scmp.ne.s32.totalorder %s73, %s87
      %p89 = scmp.eq.s32.totalorder %s21, 0
      %p90 = por %p88, %p89
      %s91 = ssub.s32 %s15, %s22
      %p92 = scmp.eq.s32.totalorder %s91, 0
      %s94 = sadd.s32 %s93, 1
      %s95 = scalar_select %p92, %s93, %s94
      %p98 = pneg %p92
      %p99 = scmp.eq.s32.totalorder %s15, 3
      %p100 = por %p98, %p99
      %p101 = scmp.ne.s32.totalorder %s93, %s96
      %p102 = scmp.eq.s32.totalorder %s15, 0
      %p103 = por %p101, %p102
      %p104 = scmp.ne.s32.totalorder %s93, %s96
      %p105 = scmp.eq.s32.totalorder %s20, 3
      %p106 = por %p104, %p105
      %p107 = scmp.ne.s32.totalorder %s96, %s97
      %p108 = scmp.eq.s32.totalorder %s20, 0
      %p109 = por %p107, %p108
      %p110 = scmp.ne.s32.totalorder %s96, %s97
      %p111 = scmp.eq.s32.totalorder %s21, 3
      %p112 = por %p110, %p111
      %p114 = scmp.ne.s32.totalorder %s97, %s113
      %p115 = scmp.eq.s32.totalorder %s21, 0
      %p116 = por %p114, %p115
      %p117 = scmp.le.s32.totalorder 1, %s15
      %p118 = scmp.lt.s32.totalorder %s15, 5
      %p119 = pnand %p117, %p118
      %p120 = pneg %p119
      // Predicated region
      $region9: #{tpu_custom_call.1} parent=5 // pred_check
        _
      $region10: #{tpu_custom_call.1} parent=5 // pred_check_branch
        %122 = sbr.rel (%p119) target = $region12
      $region11: #{tpu_custom_call.1} parent=5 // pred_region
        %s123 = ssub.s32 %s15, 1
        // Predicated region
        $region13: #{tpu_custom_call.1} parent=11 // pred_check
          %p124 = pneg %p62
        $region14: #{tpu_custom_call.1} parent=11 // pred_check_branch
          %126 = sbr.rel (%p124) target = $region16
        $region15: #{tpu_custom_call.1} parent=11 // pred_region
          _
        $region16: #{tpu_custom_call.1} parent=11 // pred_fallthru
          _
        // Predicated region
        $region17: #{tpu_custom_call.1} parent=11 // pred_check
          %p127 = pneg %p83
        $region18: #{tpu_custom_call.1} parent=11 // pred_check_branch
          %129 = sbr.rel (%p127) target = $region20
        $region19: #{tpu_custom_call.1} parent=11 // pred_region
          _
        $region20: #{tpu_custom_call.1} parent=11 // pred_fallthru
          _
      $region12: #{tpu_custom_call.1} parent=5 // pred_fallthru
        _
      %p130 = scmp.lt.s32.totalorder %s15, 4
      // Predicated region
      $region21: #{tpu_custom_call.1} parent=5 // pred_check
        %p131 = pneg %p130
      $region22: #{tpu_custom_call.1} parent=5 // pred_check_branch
        %133 = sbr.rel (%p131) target = $region24
      $region23: #{tpu_custom_call.1} parent=5 // pred_region
        // Predicated region
        $region25: #{tpu_custom_call.1} parent=23 // pred_check
          %p134 = pneg %p35
        $region26: #{tpu_custom_call.1} parent=23 // pred_check_branch
          %136 = sbr.rel (%p134) target = $region28
        $region27: #{tpu_custom_call.1} parent=23 // pred_region
          %s137 = sand.u32 %s25, 1
          %s138 = scalar_lea.sflag [#allocation3], %s137
          %s139 = sand.u32 %s25, 1
          %s140 = smul.addr %s139, 128
          %s141 = scalar_lea.vmem [#allocation2], %s140
          %s142 = smul.u32 16, %s15
          %s144 = ssub.s32 2048, 2048
          %145 = vsyncadd %s138, %s144
          %s146 = smul.addr %s142, 128
          %s147 = scalar_lea.hbm %s0, %s146
          %s148 = sshll.u32 %s141, 4
          %s149 = int_to_ptr.vmem [resolvable:$true] %s148
          %154 = dma.hbm_to_vmem [thread:$0]  %s147, 2048, %s149, %s138, 128, 128, 8
        $region28: #{tpu_custom_call.1} parent=23 // pred_fallthru
          _
      $region24: #{tpu_custom_call.1} parent=5 // pred_fallthru
        _
      %p155 = scmp.le.s32.totalorder 1, %s15
      %p156 = scmp.lt.s32.totalorder %s15, 5
      %p157 = pnand %p155, %p156
      %p158 = pneg %p157
      // Predicated region
      $region29: #{tpu_custom_call.1} parent=5 // pred_check
        _
      $region30: #{tpu_custom_call.1} parent=5 // pred_check_branch
        %160 = sbr.rel (%p157) target = $region32
      $region31: #{tpu_custom_call.1} parent=5 // pred_region
        %s161 = ssub.s32 %s15, 1
        %s162 = sand.u32 %s28, 1
        %s163 = scalar_lea.sflag [#allocation3], %s162
        %s164 = sand.u32 %s28, 1
        %s165 = smul.addr %s164, 128
        %s166 = scalar_lea.vmem [#allocation2], %s165
        // Predicated region
        $region33: #{tpu_custom_call.1} parent=31 // pred_check
          %p167 = pneg %p41
        $region34: #{tpu_custom_call.1} parent=31 // pred_check_branch
          %169 = sbr.rel (%p167) target = $region36
        $region35: #{tpu_custom_call.1} parent=31 // pred_region
          %170 = dma.done %s163, 2048
        $region36: #{tpu_custom_call.1} parent=31 // pred_fallthru
          _
        %s171 = sand.u32 %s28, 1
        %s172 = scalar_lea.sflag [#allocation3], %s171
        %s173 = sand.u32 %s28, 1
        %s174 = smul.addr %s173, 128
        %s175 = scalar_lea.vmem [#allocation2], %s174
        %p176 = pneg %p41
        %p177 = pneg %p38
        %p178 = pneg %p62
        %p179 = pneg %p59
        %p180 = pneg %p83
        %p181 = pneg %p80
        %p182 = pneg %p109
        %p183 = pneg %p106
        %s184 = sand.u32 %s96, 1
        %s185 = scalar_lea.sflag [#allocation4], %s184
        %s186 = sand.u32 %s96, 1
        %s187 = smul.addr %s186, 128
        %s188 = scalar_lea.vmem [#allocation5], %s187
        %s189 = smul.u32 16, %s20
        %s190 = smul.u32 16, %s20
        %v191 = vld [vmem:[%s166] sm:$0xff]
        %v192 = vld [vmem:[%s166 + $0x8] sm:$0xff]
        %v193 = vld [vmem:[%s166 + $0x10] sm:$0xff]
        %v194 = vld [vmem:[%s166 + $0x18] sm:$0xff]
        %v195 = vld [vmem:[%s166 + $0x20] sm:$0xff]
        %v196 = vld [vmem:[%s166 + $0x28] sm:$0xff]
        %v197 = vld [vmem:[%s166 + $0x30] sm:$0xff]
        %v198 = vld [vmem:[%s166 + $0x38] sm:$0xff]
        %v199 = vld [vmem:[%s166 + $0x40] sm:$0xff]
        %v200 = vld [vmem:[%s166 + $0x48] sm:$0xff]
        %v201 = vld [vmem:[%s166 + $0x50] sm:$0xff]
        %v202 = vld [vmem:[%s166 + $0x58] sm:$0xff]
        %v203 = vld [vmem:[%s166 + $0x60] sm:$0xff]
        %v204 = vld [vmem:[%s166 + $0x68] sm:$0xff]
        %v205 = vld [vmem:[%s166 + $0x70] sm:$0xff]
        %v206 = vld [vmem:[%s166 + $0x78] sm:$0xff]
        %207 = vadd.xlane.f32.xlu0 %v191
        %v208 = vpop.xlane.xlu0 %207
        %209 = vadd.xlane.f32.xlu0 %v192
        %v210 = vpop.xlane.xlu0 %209
        %211 = vadd.xlane.f32.xlu0 %v193
        %v212 = vpop.xlane.xlu0 %211
        %213 = vadd.xlane.f32.xlu0 %v194
        %v214 = vpop.xlane.xlu0 %213
        %215 = vadd.xlane.f32.xlu0 %v195
        %v216 = vpop.xlane.xlu0 %215
        %217 = vadd.xlane.f32.xlu0 %v196
        %v218 = vpop.xlane.xlu0 %217
        %219 = vadd.xlane.f32.xlu0 %v197
        %v220 = vpop.xlane.xlu0 %219
        %221 = vadd.xlane.f32.xlu0 %v198
        %v222 = vpop.xlane.xlu0 %221
        %223 = vadd.xlane.f32.xlu0 %v199
        %v224 = vpop.xlane.xlu0 %223
        %225 = vadd.xlane.f32.xlu0 %v200
        %v226 = vpop.xlane.xlu0 %225
        %227 = vadd.xlane.f32.xlu0 %v201
        %v228 = vpop.xlane.xlu0 %227
        %229 = vadd.xlane.f32.xlu0 %v202
        %v230 = vpop.xlane.xlu0 %229
        %231 = vadd.xlane.f32.xlu0 %v203
        %v232 = vpop.xlane.xlu0 %231
        %233 = vadd.xlane.f32.xlu0 %v204
        %v234 = vpop.xlane.xlu0 %233
        %235 = vadd.xlane.f32.xlu0 %v205
        %v236 = vpop.xlane.xlu0 %235
        %237 = vadd.xlane.f32.xlu0 %v206
        %v238 = vpop.xlane.xlu0 %237
        %v239 = vmul.f32 %v191, %v191
        %v240 = vmul.f32 %v192, %v192
        %v241 = vmul.f32 %v193, %v193
        %v242 = vmul.f32 %v194, %v194
        %v243 = vmul.f32 %v195, %v195
        %v244 = vmul.f32 %v196, %v196
        %v245 = vmul.f32 %v197, %v197
        %v246 = vmul.f32 %v198, %v198
        %v247 = vmul.f32 %v199, %v199
        %v248 = vmul.f32 %v200, %v200
        %v249 = vmul.f32 %v201, %v201
        %v250 = vmul.f32 %v202, %v202
        %v251 = vmul.f32 %v203, %v203
        %v252 = vmul.f32 %v204, %v204
        %v253 = vmul.f32 %v205, %v205
        %v254 = vmul.f32 %v206, %v206
        %255 = vadd.xlane.f32.xlu0 %v239
        %v256 = vpop.xlane.xlu0 %255
        %257 = vadd.xlane.f32.xlu0 %v240
        %v258 = vpop.xlane.xlu0 %257
        %259 = vadd.xlane.f32.xlu0 %v241
        %v260 = vpop.xlane.xlu0 %259
        %261 = vadd.xlane.f32.xlu0 %v242
        %v262 = vpop.xlane.xlu0 %261
        %263 = vadd.xlane.f32.xlu0 %v243
        %v264 = vpop.xlane.xlu0 %263
        %265 = vadd.xlane.f32.xlu0 %v244
        %v266 = vpop.xlane.xlu0 %265
        %267 = vadd.xlane.f32.xlu0 %v245
        %v268 = vpop.xlane.xlu0 %267
        %269 = vadd.xlane.f32.xlu0 %v246
        %v270 = vpop.xlane.xlu0 %269
        %271 = vadd.xlane.f32.xlu0 %v247
        %v272 = vpop.xlane.xlu0 %271
        %273 = vadd.xlane.f32.xlu0 %v248
        %v274 = vpop.xlane.xlu0 %273
        %275 = vadd.xlane.f32.xlu0 %v249
        %v276 = vpop.xlane.xlu0 %275
        %277 = vadd.xlane.f32.xlu0 %v250
        %v278 = vpop.xlane.xlu0 %277
        %279 = vadd.xlane.f32.xlu0 %v251
        %v280 = vpop.xlane.xlu0 %279
        %281 = vadd.xlane.f32.xlu0 %v252
        %v282 = vpop.xlane.xlu0 %281
        %283 = vadd.xlane.f32.xlu0 %v253
        %v284 = vpop.xlane.xlu0 %283
        %285 = vadd.xlane.f32.xlu0 %v254
        %v286 = vpop.xlane.xlu0 %285
        %v287 = vmul.f32 %v208, 0.0078125
        %v288 = vmul.f32 %v210, 0.0078125
        %v289 = vmul.f32 %v212, 0.0078125
        %v290 = vmul.f32 %v214, 0.0078125
        %v291 = vmul.f32 %v216, 0.0078125
        %v292 = vmul.f32 %v218, 0.0078125
        %v293 = vmul.f32 %v220, 0.0078125
        %v294 = vmul.f32 %v222, 0.0078125
        %v295 = vmul.f32 %v224, 0.0078125
        %v296 = vmul.f32 %v226, 0.0078125
        %v297 = vmul.f32 %v228, 0.0078125
        %v298 = vmul.f32 %v230, 0.0078125
        %v299 = vmul.f32 %v232, 0.0078125
        %v300 = vmul.f32 %v234, 0.0078125
        %v301 = vmul.f32 %v236, 0.0078125
        %v302 = vmul.f32 %v238, 0.0078125
        %v303 = vmul.f32 %v256, 0.0078125
        %v304 = vmul.f32 %v258, 0.0078125
        %v305 = vmul.f32 %v260, 0.0078125
        %v306 = vmul.f32 %v262, 0.0078125
        %v307 = vmul.f32 %v264, 0.0078125
        %v308 = vmul.f32 %v266, 0.0078125
        %v309 = vmul.f32 %v268, 0.0078125
        %v310 = vmul.f32 %v270, 0.0078125
        %v311 = vmul.f32 %v272, 0.0078125
        %v312 = vmul.f32 %v274, 0.0078125
        %v313 = vmul.f32 %v276, 0.0078125
        %v314 = vmul.f32 %v278, 0.0078125
        %v315 = vmul.f32 %v280, 0.0078125
        %v316 = vmul.f32 %v282, 0.0078125
        %v317 = vmul.f32 %v284, 0.0078125
        %v318 = vmul.f32 %v286, 0.0078125
        %v319 = vmul.f32 %v287, %v287
        %v320 = vmul.f32 %v288, %v288
        %v321 = vmul.f32 %v289, %v289
        %v322 = vmul.f32 %v290, %v290
        %v323 = vmul.f32 %v291, %v291
        %v324 = vmul.f32 %v292, %v292
        %v325 = vmul.f32 %v293, %v293
        %v326 = vmul.f32 %v294, %v294
        %v327 = vmul.f32 %v295, %v295
        %v328 = vmul.f32 %v296, %v296
        %v329 = vmul.f32 %v297, %v297
        %v330 = vmul.f32 %v298, %v298
        %v331 = vmul.f32 %v299, %v299
        %v332 = vmul.f32 %v300, %v300
        %v333 = vmul.f32 %v301, %v301
        %v334 = vmul.f32 %v302, %v302
        %v335 = vsub.f32 %v303, %v319
        %v336 = vsub.f32 %v304, %v320
        %v337 = vsub.f32 %v305, %v321
        %v338 = vsub.f32 %v306, %v322
        %v339 = vsub.f32 %v307, %v323
        %v340 = vsub.f32 %v308, %v324
        %v341 = vsub.f32 %v309, %v325
        %v342 = vsub.f32 %v310, %v326
        %v343 = vsub.f32 %v311, %v327
        %v344 = vsub.f32 %v312, %v328
        %v345 = vsub.f32 %v313, %v329
        %v346 = vsub.f32 %v314, %v330
        %v347 = vsub.f32 %v315, %v331
        %v348 = vsub.f32 %v316, %v332
        %v349 = vsub.f32 %v317, %v333
        %v350 = vsub.f32 %v318, %v334
        %v351 = vmax.f32 %v335, 0.0
        %v352 = vmax.f32 %v336, 0.0
        %v353 = vmax.f32 %v337, 0.0
        %v354 = vmax.f32 %v338, 0.0
        %v355 = vmax.f32 %v339, 0.0
        %v356 = vmax.f32 %v340, 0.0
        %v357 = vmax.f32 %v341, 0.0
        %v358 = vmax.f32 %v342, 0.0
        %v359 = vmax.f32 %v343, 0.0
        %v360 = vmax.f32 %v344, 0.0
        %v361 = vmax.f32 %v345, 0.0
        %v362 = vmax.f32 %v346, 0.0
        %v363 = vmax.f32 %v347, 0.0
        %v364 = vmax.f32 %v348, 0.0
        %v365 = vmax.f32 %v349, 0.0
        %v366 = vmax.f32 %v350, 0.0
        %v367 = vadd.f32 %v351, 1e-05
        %v368 = vadd.f32 %v352, 1e-05
        %v369 = vadd.f32 %v353, 1e-05
        %v370 = vadd.f32 %v354, 1e-05
        %v371 = vadd.f32 %v355, 1e-05
        %v372 = vadd.f32 %v356, 1e-05
        %v373 = vadd.f32 %v357, 1e-05
        %v374 = vadd.f32 %v358, 1e-05
        %v375 = vadd.f32 %v359, 1e-05
        %v376 = vadd.f32 %v360, 1e-05
        %v377 = vadd.f32 %v361, 1e-05
        %v378 = vadd.f32 %v362, 1e-05
        %v379 = vadd.f32 %v363, 1e-05
        %v380 = vadd.f32 %v364, 1e-05
        %v381 = vadd.f32 %v365, 1e-05
        %v382 = vadd.f32 %v366, 1e-05
        %v383 = vrsqrt.pop %v367
        %v384 = vrsqrt.pop %v368
        %v385 = vrsqrt.pop %v369
        %v386 = vrsqrt.pop %v370
        %v387 = vrsqrt.pop %v371
        %v388 = vrsqrt.pop %v372
        %v389 = vrsqrt.pop %v373
        %v390 = vrsqrt.pop %v374
        %v391 = vrsqrt.pop %v375
        %v392 = vrsqrt.pop %v376
        %v393 = vrsqrt.pop %v377
        %v394 = vrsqrt.pop %v378
        %v395 = vrsqrt.pop %v379
        %v396 = vrsqrt.pop %v380
        %v397 = vrsqrt.pop %v381
        %v398 = vrsqrt.pop %v382
        %v399 = vld [vmem:[%s1] sm:$0x1]
        %v400 = vld [vmem:[%s2] sm:$0x1]
        %v401 = vsub.f32 %v191, %v287
        %v402 = vsub.f32 %v192, %v288
        %v403 = vsub.f32 %v193, %v289
        %v404 = vsub.f32 %v194, %v290
        %v405 = vsub.f32 %v195, %v291
        %v406 = vsub.f32 %v196, %v292
        %v407 = vsub.f32 %v197, %v293
        %v408 = vsub.f32 %v198, %v294
        %v409 = vsub.f32 %v199, %v295
        %v410 = vsub.f32 %v200, %v296
        %v411 = vsub.f32 %v201, %v297
        %v412 = vsub.f32 %v202, %v298
        %v413 = vsub.f32 %v203, %v299
        %v414 = vsub.f32 %v204, %v300
        %v415 = vsub.f32 %v205, %v301
        %v416 = vsub.f32 %v206, %v302
        %v417 = vmul.f32 %v401, %v383
        %v418 = vmul.f32 %v402, %v384
        %v419 = vmul.f32 %v403, %v385
        %v420 = vmul.f32 %v404, %v386
        %v421 = vmul.f32 %v405, %v387
        %v422 = vmul.f32 %v406, %v388
        %v423 = vmul.f32 %v407, %v389
        %v424 = vmul.f32 %v408, %v390
        %v425 = vmul.f32 %v409, %v391
        %v426 = vmul.f32 %v410, %v392
        %v427 = vmul.f32 %v411, %v393
        %v428 = vmul.f32 %v412, %v394
        %v429 = vmul.f32 %v413, %v395
        %v430 = vmul.f32 %v414, %v396
        %v431 = vmul.f32 %v415, %v397
        %v432 = vmul.f32 %v416, %v398
        %v434 = vlaneseq
        %v435 = vshrl.u32 %v434, 7
        %v436 = vsub.s32 0, %v435
        %v437 = vrot.slane %v399, %v436
        %v439 = vmul.f32 %v417, %v437
        %v440 = vmul.f32 %v418, %v437
        %v441 = vmul.f32 %v419, %v437
        %v442 = vmul.f32 %v420, %v437
        %v443 = vmul.f32 %v421, %v437
        %v444 = vmul.f32 %v422, %v437
        %v445 = vmul.f32 %v423, %v437
        %v446 = vmul.f32 %v424, %v437
        %v447 = vmul.f32 %v425, %v437
        %v448 = vmul.f32 %v426, %v437
        %v449 = vmul.f32 %v427, %v437
        %v450 = vmul.f32 %v428, %v437
        %v451 = vmul.f32 %v429, %v437
        %v452 = vmul.f32 %v430, %v437
        %v453 = vmul.f32 %v431, %v437
        %v454 = vmul.f32 %v432, %v437
        %v456 = vlaneseq
        %v457 = vshrl.u32 %v456, 7
        %v458 = vsub.s32 0, %v457
        %v459 = vrot.slane %v400, %v458
        %v461 = vadd.f32 %v439, %v459
        %v462 = vadd.f32 %v440, %v459
        %v463 = vadd.f32 %v441, %v459
        %v464 = vadd.f32 %v442, %v459
        %v465 = vadd.f32 %v443, %v459
        %v466 = vadd.f32 %v444, %v459
        %v467 = vadd.f32 %v445, %v459
        %v468 = vadd.f32 %v446, %v459
        %v469 = vadd.f32 %v447, %v459
        %v470 = vadd.f32 %v448, %v459
        %v471 = vadd.f32 %v449, %v459
        %v472 = vadd.f32 %v450, %v459
        %v473 = vadd.f32 %v451, %v459
        %v474 = vadd.f32 %v452, %v459
        %v475 = vadd.f32 %v453, %v459
        %v476 = vadd.f32 %v454, %v459
        %477 = vst [vmem:[%s188] sm:$0xff] %v461
        %478 = vst [vmem:[%s188 + $0x8] sm:$0xff] %v462
        %479 = vst [vmem:[%s188 + $0x10] sm:$0xff] %v463
        %480 = vst [vmem:[%s188 + $0x18] sm:$0xff] %v464
        %481 = vst [vmem:[%s188 + $0x20] sm:$0xff] %v465
        %482 = vst [vmem:[%s188 + $0x28] sm:$0xff] %v466
        %483 = vst [vmem:[%s188 + $0x30] sm:$0xff] %v467
        %484 = vst [vmem:[%s188 + $0x38] sm:$0xff] %v468
        %485 = vst [vmem:[%s188 + $0x40] sm:$0xff] %v469
        %486 = vst [vmem:[%s188 + $0x48] sm:$0xff] %v470
        %487 = vst [vmem:[%s188 + $0x50] sm:$0xff] %v471
        %488 = vst [vmem:[%s188 + $0x58] sm:$0xff] %v472
        %489 = vst [vmem:[%s188 + $0x60] sm:$0xff] %v473
        %490 = vst [vmem:[%s188 + $0x68] sm:$0xff] %v474
        %491 = vst [vmem:[%s188 + $0x70] sm:$0xff] %v475
        %492 = vst [vmem:[%s188 + $0x78] sm:$0xff] %v476
        %s493 = sand.u32 %s96, 1
        %s494 = scalar_lea.sflag [#allocation4], %s493
        %s495 = sand.u32 %s96, 1
        %s496 = smul.addr %s495, 128
        %s497 = scalar_lea.vmem [#allocation5], %s496
        // Predicated region
        $region37: #{tpu_custom_call.1} parent=31 // pred_check
          %p498 = pneg %p106
        $region38: #{tpu_custom_call.1} parent=31 // pred_check_branch
          %500 = sbr.rel (%p498) target = $region40
        $region39: #{tpu_custom_call.1} parent=31 // pred_region
          %s501 = smul.u32 16, %s20
          %s503 = ssub.s32 2048, 2048
          %504 = vsyncadd %s494, %s503
          %s505 = smul.addr %s501, 128
          %s506 = scalar_lea.hbm %s3, %s505
          %s507 = sshll.u32 %s497, 4
          %s508 = int_to_ptr.vmem [resolvable:$true] %s507
          %513 = dma.vmem_to_hbm [thread:$0]  %s508, 2048, %s506, %s494, 128, 128, 8
        $region40: #{tpu_custom_call.1} parent=31 // pred_fallthru
          _
      $region32: #{tpu_custom_call.1} parent=5 // pred_fallthru
        _
      %p514 = scmp.le.s32.totalorder 2, %s15
      // Predicated region
      $region41: #{tpu_custom_call.1} parent=5 // pred_check
        %p515 = pneg %p514
      $region42: #{tpu_custom_call.1} parent=5 // pred_check_branch
        %517 = sbr.rel (%p515) target = $region44
      $region43: #{tpu_custom_call.1} parent=5 // pred_region
        %s518 = ssub.s32 %s15, 2
        // Predicated region
        $region45: #{tpu_custom_call.1} parent=43 // pred_check
          %p519 = pneg %p112
        $region46: #{tpu_custom_call.1} parent=43 // pred_check_branch
          %521 = sbr.rel (%p519) target = $region48
        $region47: #{tpu_custom_call.1} parent=43 // pred_region
          %s522 = sand.u32 %s97, 1
          %s523 = scalar_lea.sflag [#allocation4], %s522
          %s524 = sand.u32 %s97, 1
          %s525 = smul.addr %s524, 128
          %s526 = scalar_lea.vmem [#allocation5], %s525
          %527 = dma.done %s523, 2048
        $region48: #{tpu_custom_call.1} parent=43 // pred_fallthru
          _
      $region44: #{tpu_custom_call.1} parent=5 // pred_fallthru
        _
    $region6: #{tpu_custom_call.1} parent=1 // loop_footer
      %s19 = sadd.s32 1, %s15
    $region7: #{tpu_custom_call.1} parent=1 // loop_footer_branch
      %14 = sbr.rel target = $region3
    $region8: #{tpu_custom_call.1} parent=1 // loop_exit
      _
    %528 = vsyncpa [#allocation3], 1
    %s529 = scalar_lea.sflag [#allocation3], 1
    %530 = vsyncpa %s529, 1
    %531 = vsyncpa [#allocation4], 1
    %s532 = scalar_lea.sflag [#allocation4], 1
    %533 = vsyncpa %s532, 1

</llo_original>
